<compile_context>
chip_gen: v5e
topology: v5e:2x2
jax: 0.10.0
libtpu: 0.0.40
codegen_flags: <defaults>
</compile_context>

<pallas_src>
import jax
import jax.numpy as jnp
from jax.experimental import pallas as pl
from jax.experimental.pallas import tpu as pltpu

# ---- small, module-consistent sizes (module hardcodes class_emb=1000,
#      hidden=2*class_emb; scaled down here, structure preserved) ----
Z_DIM = 32
K_PAD = 128                 # first-GEMM contraction dim padded to a lane group
CLASS_EMB_DIM = 128
HIDDEN = 2 * CLASS_EMB_DIM
NEG_SLOPE = 0.01            # nn.LeakyReLU() default negative_slope
MIN_BATCH_TILE = 16         # one bf16 sublane group
MAX_BATCH_TILE = 256


def _round_up(n, m):
    return ((n + m - 1) // m) * m


def _choose_batch_tile(batch):
    """Pick the batch tile: as large as possible (<=256), but keep >=2 grid
    steps once the padded batch is >=32 rows so v7x's two TCs both get work."""
    b16 = _round_up(batch, MIN_BATCH_TILE)
    if b16 < 2 * MIN_BATCH_TILE:
        return b16
    return min(MAX_BATCH_TILE, _round_up((b16 + 1) // 2, MIN_BATCH_TILE))


def classup_kernel(x_ref,
                   w0_ref, b0_ref,
                   w1_ref, b1_ref,
                   w2_ref, b2_ref,
                   w3_ref, b3_ref,
                   out_ref):
    """Fused MLP (depth=2 hidden blocks) + LeakyReLU + final softmax.

    bf16 operands into the MXU, f32 accumulation, f32 elementwise epilogue.
    """

    def leaky(h):                      # f32 elementwise (VPU)
        return jnp.where(h > 0, h, NEG_SLOPE * h)

    x = x_ref[...]                     # bf16 (tile_b, K_PAD)

    h = jnp.dot(x, w0_ref[...], preferred_element_type=jnp.float32) + b0_ref[...]
    h = leaky(h).astype(jnp.bfloat16)
    h = jnp.dot(h, w1_ref[...], preferred_element_type=jnp.float32) + b1_ref[...]
    h = leaky(h).astype(jnp.bfloat16)
    h = jnp.dot(h, w2_ref[...], preferred_element_type=jnp.float32) + b2_ref[...]
    h = leaky(h).astype(jnp.bfloat16)
    logits = jnp.dot(h, w3_ref[...], preferred_element_type=jnp.float32) + b3_ref[...]

    # softmax over dim=1 (feature axis of the 2-D (B, C) slab), f32, exact.
    m = jnp.max(logits, axis=-1, keepdims=True)
    e = jnp.exp(logits - m)
    denom = jnp.sum(e, axis=-1, keepdims=True)
    out_ref[...] = (e / denom).astype(out_ref.dtype)


def init_classup_params(key, z_dim=Z_DIM, hidden=HIDDEN, out_dim=CLASS_EMB_DIM):
    """Deterministic synthetic parameters (PyTorch Linear shapes, stored transposed)."""
    dims = [(z_dim, hidden), (hidden, hidden), (hidden, hidden), (hidden, out_dim)]
    params = []
    for d_in, d_out in dims:
        kw, kb, key = jax.random.split(key, 3)
        bound = 1.0 / (d_in ** 0.5)
        w = jax.random.uniform(kw, (d_in, d_out), jnp.float32, -bound, bound)
        b = jax.random.uniform(kb, (1, d_out), jnp.float32, -bound, bound)
        params.append((w, b))
    return params


def biggan_decoder_wrapper_forward(x_nchw, params):
    """Forward of BigGANDecoderWrapper (ClassUp stage in Pallas)."""
    B = x_nchw.shape[0]
    # x.squeeze(-1).squeeze(-1) -> (B, z_dim); cast once to bf16 for the MXU.
    x2d = x_nchw.reshape(B, x_nchw.shape[1]).astype(jnp.bfloat16)

    tile_b = _choose_batch_tile(B)
    B_pad = _round_up(B, tile_b)
    n_tiles = B_pad // tile_b

    # Pad batch rows (zeros, sliced off afterwards — never reduced over) and
    # zero-pad the contraction dim of the first GEMM to a full 128-lane group.
    x_padded = jnp.pad(x2d, ((0, B_pad - B), (0, K_PAD - x2d.shape[1])))

    (w0, b0), (w1, b1), (w2, b2), (w3, b3) = params
    w0b = jnp.pad(w0.astype(jnp.bfloat16), ((0, K_PAD - w0.shape[0]), (0, 0)))
    w1b = w1.astype(jnp.bfloat16)
    w2b = w2.astype(jnp.bfloat16)
    w3b = w3.astype(jnp.bfloat16)

    def resident_spec(shape):
        # Weights / biases fully resident; constant index map, so single-buffer
        # them (no pipelining benefit, half the VMEM footprint).
        return pl.BlockSpec(shape, lambda i: (0, 0), pipeline_mode=pl.Buffered(1))

    emb_padded = pl.pallas_call(
        classup_kernel,
        out_shape=jax.ShapeDtypeStruct((B_pad, CLASS_EMB_DIM), jnp.float32),
        grid=(n_tiles,),
        in_specs=[
            pl.BlockSpec((tile_b, K_PAD), lambda i: (i, 0)),
            resident_spec(w0b.shape), resident_spec(b0.shape),
            resident_spec(w1b.shape), resident_spec(b1.shape),
            resident_spec(w2b.shape), resident_spec(b2.shape),
            resident_spec(w3b.shape), resident_spec(b3.shape),
        ],
        out_specs=pl.BlockSpec((tile_b, CLASS_EMB_DIM), lambda i: (i, 0)),
        compiler_params=pltpu.CompilerParams(
            dimension_semantics=("parallel",),
            vmem_limit_bytes=48 * 1024 * 1024),
    )(x_padded, w0b, b0, w1b, b1, w2b, b2, w3b, b3)

    emb = emb_padded[:B]

    # TODO(synk): self.decoder(x, emb) — BigGAN generator source not provided.
    return emb


def classup_reference(x_nchw, params):
    """Pure-JAX reference with matching bf16-operand / f32-accumulate numerics."""
    x = x_nchw.reshape(x_nchw.shape[0], x_nchw.shape[1]).astype(jnp.bfloat16)
    (w0, b0), (w1, b1), (w2, b2), (w3, b3) = params

    def leaky(h):
        return jnp.where(h > 0, h, NEG_SLOPE * h)

    def lin(a, w, b):
        return jnp.dot(a, w.astype(jnp.bfloat16),
                       preferred_element_type=jnp.float32) + b

    h = leaky(lin(x, w0, b0)).astype(jnp.bfloat16)
    h = leaky(lin(h, w1, b1)).astype(jnp.bfloat16)
    h = leaky(lin(h, w2, b2)).astype(jnp.bfloat16)
    logits = lin(h, w3, b3)
    return jax.nn.softmax(logits, axis=1)


if __name__ == "__main__":
    key = jax.random.PRNGKey(0)
    kx, kp = jax.random.split(key)

    B = 2
    # PyTorch input convention: (B, z_dim, 1, 1) NCHW latent
    x = jax.random.normal(kx, (B, Z_DIM, 1, 1), dtype=jnp.float32)
    params = init_classup_params(kp)

    out = biggan_decoder_wrapper_forward(x, params)
    out = jax.block_until_ready(out)

    ref = classup_reference(x, params)
    assert out.shape == (B, CLASS_EMB_DIM)
    # bf16 matmuls -> modest tolerance; softmax normalization itself is exact f32
    assert jnp.allclose(out, ref, atol=2e-3, rtol=2e-3)
    assert jnp.allclose(jnp.sum(out, axis=1), jnp.ones((B,)), atol=1e-4)

    print("KERNEL_OK")
</pallas_src>

<mosaic_0001>
module attributes {stable_mosaic.version = 11 : i64} {
  func.func @classup_kernel(%arg0: i32, %arg1: memref<16x128xbf16, #tpu.memory_space<vmem>>, %arg2: memref<128x256xbf16, #tpu.memory_space<vmem>>, %arg3: memref<1x256xf32, #tpu.memory_space<vmem>>, %arg4: memref<256x256xbf16, #tpu.memory_space<vmem>>, %arg5: memref<1x256xf32, #tpu.memory_space<vmem>>, %arg6: memref<256x256xbf16, #tpu.memory_space<vmem>>, %arg7: memref<1x256xf32, #tpu.memory_space<vmem>>, %arg8: memref<256x128xbf16, #tpu.memory_space<vmem>>, %arg9: memref<1x128xf32, #tpu.memory_space<vmem>>, %arg10: memref<16x128xf32, #tpu.memory_space<vmem>>) attributes {dimension_semantics = [#tpu.dimension_semantics<parallel>], iteration_bounds = array<i64: 1>, scalar_prefetch = 0 : i64, scratch_operands = 0 : i64, tpu.core_type = #tpu.core_type<tc>, window_params = [{transform_indices = @transform_0, window_bounds = array<i64: 16, 128>}, {pipeline_mode = #tpu.pipeline_mode<synchronous>, transform_indices = @transform_1, window_bounds = array<i64: 128, 256>}, {pipeline_mode = #tpu.pipeline_mode<synchronous>, transform_indices = @transform_2, window_bounds = array<i64: 1, 256>}, {pipeline_mode = #tpu.pipeline_mode<synchronous>, transform_indices = @transform_3, window_bounds = array<i64: 256, 256>}, {pipeline_mode = #tpu.pipeline_mode<synchronous>, transform_indices = @transform_4, window_bounds = array<i64: 1, 256>}, {pipeline_mode = #tpu.pipeline_mode<synchronous>, transform_indices = @transform_5, window_bounds = array<i64: 256, 256>}, {pipeline_mode = #tpu.pipeline_mode<synchronous>, transform_indices = @transform_6, window_bounds = array<i64: 1, 256>}, {pipeline_mode = #tpu.pipeline_mode<synchronous>, transform_indices = @transform_7, window_bounds = array<i64: 256, 128>}, {pipeline_mode = #tpu.pipeline_mode<synchronous>, transform_indices = @transform_8, window_bounds = array<i64: 1, 128>}, {transform_indices = @transform_9, window_bounds = array<i64: 16, 128>}]} {
    %c0 = arith.constant 0 : index
    %c0_0 = arith.constant 0 : index
    %0 = vector.load %arg1[%c0, %c0_0] : memref<16x128xbf16, #tpu.memory_space<vmem>>, vector<16x128xbf16>
    %c0_1 = arith.constant 0 : index
    %c0_2 = arith.constant 0 : index
    %1 = vector.load %arg2[%c0_1, %c0_2] : memref<128x256xbf16, #tpu.memory_space<vmem>>, vector<128x256xbf16>
    %cst = arith.constant dense<0.000000e+00> : vector<16x256xf32>
    %2 = tpu.matmul %0, %1, %cst {dimension_numbers = #tpu.dot_dimension_numbers<[1], [0], [0], [1], [0, 0, 1, 1], [], []>} : vector<16x128xbf16>, vector<128x256xbf16>, vector<16x256xf32> -> vector<16x256xf32>
    %c0_3 = arith.constant 0 : index
    %c0_4 = arith.constant 0 : index
    %3 = vector.load %arg3[%c0_3, %c0_4] : memref<1x256xf32, #tpu.memory_space<vmem>>, vector<1x256xf32>
    %4 = vector.broadcast %3 : vector<1x256xf32> to vector<16x256xf32>
    %5 = arith.addf %2, %4 : vector<16x256xf32>
    %cst_5 = arith.constant 0.000000e+00 : f32
    %6 = vector.broadcast %cst_5 : f32 to vector<16x256xf32>
    %7 = arith.cmpf ogt, %5, %6 : vector<16x256xf32>
    %cst_6 = arith.constant 0.00999999977 : f32
    %8 = vector.broadcast %cst_6 : f32 to vector<16x256xf32>
    %9 = arith.mulf %8, %5 : vector<16x256xf32>
    %10 = arith.select %7, %5, %9 : vector<16x256xi1>, vector<16x256xf32>
    %11 = arith.truncf %10 : vector<16x256xf32> to vector<16x256xbf16>
    %c0_7 = arith.constant 0 : index
    %c0_8 = arith.constant 0 : index
    %12 = vector.load %arg4[%c0_7, %c0_8] : memref<256x256xbf16, #tpu.memory_space<vmem>>, vector<256x256xbf16>
    %cst_9 = arith.constant dense<0.000000e+00> : vector<16x256xf32>
    %13 = tpu.matmul %11, %12, %cst_9 {dimension_numbers = #tpu.dot_dimension_numbers<[1], [0], [0], [1], [0, 0, 1, 1], [], []>} : vector<16x256xbf16>, vector<256x256xbf16>, vector<16x256xf32> -> vector<16x256xf32>
    %c0_10 = arith.constant 0 : index
    %c0_11 = arith.constant 0 : index
    %14 = vector.load %arg5[%c0_10, %c0_11] : memref<1x256xf32, #tpu.memory_space<vmem>>, vector<1x256xf32>
    %15 = vector.broadcast %14 : vector<1x256xf32> to vector<16x256xf32>
    %16 = arith.addf %13, %15 : vector<16x256xf32>
    %cst_12 = arith.constant 0.000000e+00 : f32
    %17 = vector.broadcast %cst_12 : f32 to vector<16x256xf32>
    %18 = arith.cmpf ogt, %16, %17 : vector<16x256xf32>
    %cst_13 = arith.constant 0.00999999977 : f32
    %19 = vector.broadcast %cst_13 : f32 to vector<16x256xf32>
    %20 = arith.mulf %19, %16 : vector<16x256xf32>
    %21 = arith.select %18, %16, %20 : vector<16x256xi1>, vector<16x256xf32>
    %22 = arith.truncf %21 : vector<16x256xf32> to vector<16x256xbf16>
    %c0_14 = arith.constant 0 : index
    %c0_15 = arith.constant 0 : index
    %23 = vector.load %arg6[%c0_14, %c0_15] : memref<256x256xbf16, #tpu.memory_space<vmem>>, vector<256x256xbf16>
    %cst_16 = arith.constant dense<0.000000e+00> : vector<16x256xf32>
    %24 = tpu.matmul %22, %23, %cst_16 {dimension_numbers = #tpu.dot_dimension_numbers<[1], [0], [0], [1], [0, 0, 1, 1], [], []>} : vector<16x256xbf16>, vector<256x256xbf16>, vector<16x256xf32> -> vector<16x256xf32>
    %c0_17 = arith.constant 0 : index
    %c0_18 = arith.constant 0 : index
    %25 = vector.load %arg7[%c0_17, %c0_18] : memref<1x256xf32, #tpu.memory_space<vmem>>, vector<1x256xf32>
    %26 = vector.broadcast %25 : vector<1x256xf32> to vector<16x256xf32>
    %27 = arith.addf %24, %26 : vector<16x256xf32>
    %cst_19 = arith.constant 0.000000e+00 : f32
    %28 = vector.broadcast %cst_19 : f32 to vector<16x256xf32>
    %29 = arith.cmpf ogt, %27, %28 : vector<16x256xf32>
    %cst_20 = arith.constant 0.00999999977 : f32
    %30 = vector.broadcast %cst_20 : f32 to vector<16x256xf32>
    %31 = arith.mulf %30, %27 : vector<16x256xf32>
    %32 = arith.select %29, %27, %31 : vector<16x256xi1>, vector<16x256xf32>
    %33 = arith.truncf %32 : vector<16x256xf32> to vector<16x256xbf16>
    %c0_21 = arith.constant 0 : index
    %c0_22 = arith.constant 0 : index
    %34 = vector.load %arg8[%c0_21, %c0_22] : memref<256x128xbf16, #tpu.memory_space<vmem>>, vector<256x128xbf16>
    %cst_23 = arith.constant dense<0.000000e+00> : vector<16x128xf32>
    %35 = tpu.matmul %33, %34, %cst_23 {dimension_numbers = #tpu.dot_dimension_numbers<[1], [0], [0], [1], [0, 0, 1, 1], [], []>} : vector<16x256xbf16>, vector<256x128xbf16>, vector<16x128xf32> -> vector<16x128xf32>
    %c0_24 = arith.constant 0 : index
    %c0_25 = arith.constant 0 : index
    %36 = vector.load %arg9[%c0_24, %c0_25] : memref<1x128xf32, #tpu.memory_space<vmem>>, vector<1x128xf32>
    %37 = vector.broadcast %36 : vector<1x128xf32> to vector<16x128xf32>
    %38 = arith.addf %35, %37 : vector<16x128xf32>
    %cst_26 = arith.constant dense<0xFF800000> : vector<16xf32>
    %39 = vector.multi_reduction <maximumf>, %38, %cst_26 [1] : vector<16x128xf32> to vector<16xf32>
    %40 = vector.shape_cast %39 : vector<16xf32> to vector<16x1xf32>
    %41 = vector.broadcast %40 : vector<16x1xf32> to vector<16x128xf32>
    %42 = arith.subf %38, %41 : vector<16x128xf32>
    %43 = math.exp %42 : vector<16x128xf32>
    %cst_27 = arith.constant dense<0.000000e+00> : vector<16xf32>
    %44 = vector.multi_reduction <add>, %43, %cst_27 [1] : vector<16x128xf32> to vector<16xf32>
    %45 = vector.shape_cast %44 : vector<16xf32> to vector<16x1xf32>
    %46 = vector.broadcast %45 : vector<16x1xf32> to vector<16x128xf32>
    %47 = arith.divf %43, %46 : vector<16x128xf32>
    %c0_28 = arith.constant 0 : index
    %c0_29 = arith.constant 0 : index
    %48 = vector.load %arg10[%c0_28, %c0_29] : memref<16x128xf32, #tpu.memory_space<vmem>>, vector<16x128xf32>
    tpu.vector_store %arg10[%c0_28, %c0_29], %47 {strides = array<i32>} : memref<16x128xf32, #tpu.memory_space<vmem>>, vector<16x128xf32>,
    return
  }
  func.func @transform_0(%arg0: i32) -> (i32, i32) {
    %c0_i32 = arith.constant 0 : i32
    %c0_i32_0 = arith.constant 0 : i32
    return %arg0, %c0_i32 : i32, i32
  }
  func.func @transform_1(%arg0: i32) -> (i32, i32) {
    %c0_i32 = arith.constant 0 : i32
    %c0_i32_0 = arith.constant 0 : i32
    %c0_i32_1 = arith.constant 0 : i32
    return %c0_i32, %c0_i32_0 : i32, i32
  }
  func.func @transform_2(%arg0: i32) -> (i32, i32) {
    %c0_i32 = arith.constant 0 : i32
    %c0_i32_0 = arith.constant 0 : i32
    %c0_i32_1 = arith.constant 0 : i32
    return %c0_i32, %c0_i32_0 : i32, i32
  }
  func.func @transform_3(%arg0: i32) -> (i32, i32) {
    %c0_i32 = arith.constant 0 : i32
    %c0_i32_0 = arith.constant 0 : i32
    %c0_i32_1 = arith.constant 0 : i32
    return %c0_i32, %c0_i32_0 : i32, i32
  }
  func.func @transform_4(%arg0: i32) -> (i32, i32) {
    %c0_i32 = arith.constant 0 : i32
    %c0_i32_0 = arith.constant 0 : i32
    %c0_i32_1 = arith.constant 0 : i32
    return %c0_i32, %c0_i32_0 : i32, i32
  }
  func.func @transform_5(%arg0: i32) -> (i32, i32) {
    %c0_i32 = arith.constant 0 : i32
    %c0_i32_0 = arith.constant 0 : i32
    %c0_i32_1 = arith.constant 0 : i32
    return %c0_i32, %c0_i32_0 : i32, i32
  }
  func.func @transform_6(%arg0: i32) -> (i32, i32) {
    %c0_i32 = arith.constant 0 : i32
    %c0_i32_0 = arith.constant 0 : i32
    %c0_i32_1 = arith.constant 0 : i32
    return %c0_i32, %c0_i32_0 : i32, i32
  }
  func.func @transform_7(%arg0: i32) -> (i32, i32) {
    %c0_i32 = arith.constant 0 : i32
    %c0_i32_0 = arith.constant 0 : i32
    %c0_i32_1 = arith.constant 0 : i32
    return %c0_i32, %c0_i32_0 : i32, i32
  }
  func.func @transform_8(%arg0: i32) -> (i32, i32) {
    %c0_i32 = arith.constant 0 : i32
    %c0_i32_0 = arith.constant 0 : i32
    %c0_i32_1 = arith.constant 0 : i32
    return %c0_i32, %c0_i32_0 : i32, i32
  }
  func.func @transform_9(%arg0: i32) -> (i32, i32) {
    %c0_i32 = arith.constant 0 : i32
    %c0_i32_0 = arith.constant 0 : i32
    return %arg0, %c0_i32 : i32, i32
  }
}

</mosaic_0001>

<llo_original>
// kernel: tpu_custom_call.1
$region0: #{tpu_custom_call.1}
  #allocation0 [shape = 'u32[]', space=smem, size = 0x4, offset = 0x4, fixed_abs, tag = 'smem constant byte address 0x4 - core index']
  #allocation1 [shape = 'u32[72,128]{1,0:T(1,128)}', space=vmem, size = 0x9000, scoped, tag = 'internal scratch']
  %s0 = inlined_call_operand.hbm [shape: bf16[16,128], index: 0, kind: input, shape index: {}]
  %s1 = inlined_call_operand.hbm [shape: bf16[128,256], index: 1, kind: input, shape index: {}]
  %s2 = inlined_call_operand.hbm [shape: f32[1,256], index: 2, kind: input, shape index: {}]
  %s3 = inlined_call_operand.hbm [shape: bf16[256,256], index: 3, kind: input, shape index: {}]
  %s4 = inlined_call_operand.vmem [shape: f32[1,256], index: 4, kind: input, shape index: {}]
  %s5 = inlined_call_operand.hbm [shape: bf16[256,256], index: 5, kind: input, shape index: {}]
  %s6 = inlined_call_operand.vmem [shape: f32[1,256], index: 6, kind: input, shape index: {}]
  %s7 = inlined_call_operand.hbm [shape: bf16[256,128], index: 7, kind: input, shape index: {}]
  %s8 = inlined_call_operand.vmem [shape: f32[1,128], index: 8, kind: input, shape index: {}]
  %s9 = inlined_call_operand.hbm [shape: f32[16,128], index: 9, kind: output, shape index: {}]
  %s10 = sld [smem:[#allocation0]]
  $region70: #{tpu_custom_call.1} parent=0
    _
  %s12 = ssub.s32 1, %s10
  %s13 = scalar_select 0, %s12, %s10
  $region1: #{tpu_custom_call.1} parent=0
    #allocation2 [shape = 'u8[4096]{0}', space=vmem, size = 0x1000, scoped, tag = 'input window, operand 0, single buffered']
    #allocation3 [shape = 's32[1]{0}', space=sflag, size = 0x4, scoped, tag = 'scoped memory for tpu_custom_call.1']
    #allocation4 [shape = 's32[1]{0}', space=sflag, size = 0x4, scoped, tag = 'scoped memory for tpu_custom_call.1']
    #allocation5 [shape = 'u8[65536]{0}', space=vmem, size = 0x10000, scoped, tag = 'input window, operand 1, single buffered']
    #allocation6 [shape = 's32[1]{0}', space=sflag, size = 0x4, scoped, tag = 'scoped memory for tpu_custom_call.1']
    #allocation7 [shape = 'u8[1024]{0}', space=vmem, size = 0x400, scoped, tag = 'input window, operand 2, single buffered']
    #allocation8 [shape = 'u8[131072]{0}', space=vmem, size = 0x20000, scoped, tag = 'input window, operand 3, single buffered']
    #allocation9 [shape = 's32[1]{0}', space=sflag, size = 0x4, scoped, tag = 'scoped memory for tpu_custom_call.1']
    #allocation10 [shape = 'u8[131072]{0}', space=vmem, size = 0x20000, scoped, tag = 'input window, operand 5, single buffered']
    #allocation11 [shape = 'u8[65536]{0}', space=vmem, size = 0x10000, scoped, tag = 'input window, operand 7, single buffered']
    #allocation12 [shape = 's32[1]{0}', space=sflag, size = 0x4, scoped, tag = 'scoped memory for tpu_custom_call.1']
    #allocation13 [shape = 'u8[8192]{0}', space=vmem, size = 0x2000, scoped, tag = 'output window, operand 0, single buffered']
    %14 = vsyncpa [#allocation3], 0
    %15 = vsyncpa [#allocation6], 0
    %16 = vsyncpa [#allocation9], 0
    %17 = vsyncpa [#allocation12], 0
    %18 = vsyncpa [#allocation4], 0
    // Predicated region
    $region2: #{tpu_custom_call.1} parent=1 // pred_check
      _
    $region3: #{tpu_custom_call.1} parent=1 // pred_check_branch
      %20 = sbr.rel (0) target = $region5
    $region4: #{tpu_custom_call.1} parent=1 // pred_region
      %22 = vsyncadd [#allocation3], 0
      %s23 = sshll.u32 %s0, 4
      %s24 = int_to_ptr.hbm [resolvable:$true] %s23
      %s25 = sshll.u32 [#allocation2], 4
      %s26 = int_to_ptr.vmem [resolvable:$true] %s25
      %31 = dma.hbm_to_vmem [thread:$0]  %s24, 128, %s26, [#allocation3], 64, 64, 4
    $region5: #{tpu_custom_call.1} parent=1 // pred_fallthru
      _
    // Predicated region
    $region6: #{tpu_custom_call.1} parent=1 // pred_check
      _
    $region7: #{tpu_custom_call.1} parent=1 // pred_check_branch
      %33 = sbr.rel (0) target = $region9
    $region8: #{tpu_custom_call.1} parent=1 // pred_region
      %35 = vsyncadd [#allocation6], 0
      %s36 = sshll.u32 %s1, 4
      %s37 = int_to_ptr.hbm [resolvable:$true] %s36
      %s38 = sshll.u32 [#allocation5], 4
      %s39 = int_to_ptr.vmem [resolvable:$true] %s38
      %44 = dma.hbm_to_vmem [thread:$0]  %s37, 2048, %s39, [#allocation6], 128, 128, 8
    $region9: #{tpu_custom_call.1} parent=1 // pred_fallthru
      _
    // Predicated region
    $region10: #{tpu_custom_call.1} parent=1 // pred_check
      _
    $region11: #{tpu_custom_call.1} parent=1 // pred_check_branch
      %46 = sbr.rel (0) target = $region13
    $region12: #{tpu_custom_call.1} parent=1 // pred_region
      %48 = vsyncadd [#allocation6], 0
      %s50 = sshll.u32 %s2, 4
      %s51 = int_to_ptr.hbm [resolvable:$true] %s50
      %s52 = sshll.u32 [#allocation7], 4
      %s53 = int_to_ptr.vmem [resolvable:$true] %s52
      %55 = dma.hbm_to_vmem [thread:$0]  %s51, 32, %s53, [#allocation6]
    $region13: #{tpu_custom_call.1} parent=1 // pred_fallthru
      _
    // Predicated region
    $region14: #{tpu_custom_call.1} parent=1 // pred_check
      _
    $region15: #{tpu_custom_call.1} parent=1 // pred_check_branch
      %57 = sbr.rel (0) target = $region17
    $region16: #{tpu_custom_call.1} parent=1 // pred_region
      %59 = vsyncadd [#allocation9], 0
      %s60 = sshll.u32 %s3, 4
      %s61 = int_to_ptr.hbm [resolvable:$true] %s60
      %s62 = sshll.u32 [#allocation8], 4
      %s63 = int_to_ptr.vmem [resolvable:$true] %s62
      %68 = dma.hbm_to_vmem [thread:$0]  %s61, 4096, %s63, [#allocation9], 128, 128, 8
    $region17: #{tpu_custom_call.1} parent=1 // pred_fallthru
      _
    // Predicated region
    $region18: #{tpu_custom_call.1} parent=1 // pred_check
      _
    $region19: #{tpu_custom_call.1} parent=1 // pred_check_branch
      %70 = sbr.rel (0) target = $region21
    $region20: #{tpu_custom_call.1} parent=1 // pred_region
      _
    $region21: #{tpu_custom_call.1} parent=1 // pred_fallthru
      _
    // Predicated region
    $region22: #{tpu_custom_call.1} parent=1 // pred_check
      _
    $region23: #{tpu_custom_call.1} parent=1 // pred_check_branch
      %72 = sbr.rel (0) target = $region25
    $region24: #{tpu_custom_call.1} parent=1 // pred_region
      %74 = vsyncadd [#allocation9], 0
      %s75 = sshll.u32 %s5, 4
      %s76 = int_to_ptr.hbm [resolvable:$true] %s75
      %s77 = sshll.u32 [#allocation10], 4
      %s78 = int_to_ptr.vmem [resolvable:$true] %s77
      %83 = dma.hbm_to_vmem [thread:$0]  %s76, 4096, %s78, [#allocation9], 128, 128, 8
    $region25: #{tpu_custom_call.1} parent=1 // pred_fallthru
      _
    // Predicated region
    $region26: #{tpu_custom_call.1} parent=1 // pred_check
      _
    $region27: #{tpu_custom_call.1} parent=1 // pred_check_branch
      %85 = sbr.rel (0) target = $region29
    $region28: #{tpu_custom_call.1} parent=1 // pred_region
      _
    $region29: #{tpu_custom_call.1} parent=1 // pred_fallthru
      _
    // Predicated region
    $region30: #{tpu_custom_call.1} parent=1 // pred_check
      _
    $region31: #{tpu_custom_call.1} parent=1 // pred_check_branch
      %87 = sbr.rel (0) target = $region33
    $region32: #{tpu_custom_call.1} parent=1 // pred_region
      %89 = vsyncadd [#allocation12], 0
      %s90 = sshll.u32 %s7, 4
      %s91 = int_to_ptr.hbm [resolvable:$true] %s90
      %s92 = sshll.u32 [#allocation11], 4
      %s93 = int_to_ptr.vmem [resolvable:$true] %s92
      %98 = dma.hbm_to_vmem [thread:$0]  %s91, 2048, %s93, [#allocation12], 64, 64, 4
    $region33: #{tpu_custom_call.1} parent=1 // pred_fallthru
      _
    // Predicated region
    $region34: #{tpu_custom_call.1} parent=1 // pred_check
      _
    $region35: #{tpu_custom_call.1} parent=1 // pred_check_branch
      %100 = sbr.rel (0) target = $region37
    $region36: #{tpu_custom_call.1} parent=1 // pred_region
      _
    $region37: #{tpu_custom_call.1} parent=1 // pred_fallthru
      _
    // Predicated region
    $region38: #{tpu_custom_call.1} parent=1 // pred_check
      _
    $region39: #{tpu_custom_call.1} parent=1 // pred_check_branch
      %102 = sbr.rel (0) target = $region41
    $region40: #{tpu_custom_call.1} parent=1 // pred_region
      %104 = dma.done [#allocation3], 128
    $region41: #{tpu_custom_call.1} parent=1 // pred_fallthru
      _
    // Predicated region
    $region42: #{tpu_custom_call.1} parent=1 // pred_check
      _
    $region43: #{tpu_custom_call.1} parent=1 // pred_check_branch
      %106 = sbr.rel (0) target = $region45
    $region44: #{tpu_custom_call.1} parent=1 // pred_region
      %108 = dma.done [#allocation6], 2048
    $region45: #{tpu_custom_call.1} parent=1 // pred_fallthru
      _
    // Predicated region
    $region46: #{tpu_custom_call.1} parent=1 // pred_check
      _
    $region47: #{tpu_custom_call.1} parent=1 // pred_check_branch
      %110 = sbr.rel (0) target = $region49
    $region48: #{tpu_custom_call.1} parent=1 // pred_region
      %112 = dma.done [#allocation6], 32
    $region49: #{tpu_custom_call.1} parent=1 // pred_fallthru
      _
    // Predicated region
    $region50: #{tpu_custom_call.1} parent=1 // pred_check
      _
    $region51: #{tpu_custom_call.1} parent=1 // pred_check_branch
      %114 = sbr.rel (0) target = $region53
    $region52: #{tpu_custom_call.1} parent=1 // pred_region
      %116 = dma.done [#allocation9], 4096
    $region53: #{tpu_custom_call.1} parent=1 // pred_fallthru
      _
    // Predicated region
    $region54: #{tpu_custom_call.1} parent=1 // pred_check
      _
    $region55: #{tpu_custom_call.1} parent=1 // pred_check_branch
      %118 = sbr.rel (0) target = $region57
    $region56: #{tpu_custom_call.1} parent=1 // pred_region
      %120 = dma.done [#allocation9], 4096
    $region57: #{tpu_custom_call.1} parent=1 // pred_fallthru
      _
    // Predicated region
    $region58: #{tpu_custom_call.1} parent=1 // pred_check
      _
    $region59: #{tpu_custom_call.1} parent=1 // pred_check_branch
      %122 = sbr.rel (0) target = $region61
    $region60: #{tpu_custom_call.1} parent=1 // pred_region
      %124 = dma.done [#allocation12], 2048
    $region61: #{tpu_custom_call.1} parent=1 // pred_fallthru
      _
    %v125 = vld [vmem:[#allocation2] sm:$0xf]
    %v126 = vld [vmem:[#allocation2 + $0x4] sm:$0xf]
    %v127 = vld [vmem:[#allocation5] sm:$0xff]
    %v128 = vld [vmem:[#allocation5 + $0x8] sm:$0xff]
    %v129 = vld [vmem:[#allocation5 + $0x10] sm:$0xff]
    %v130 = vld [vmem:[#allocation5 + $0x18] sm:$0xff]
    %v131 = vld [vmem:[#allocation5 + $0x20] sm:$0xff]
    %v132 = vld [vmem:[#allocation5 + $0x28] sm:$0xff]
    %v133 = vld [vmem:[#allocation5 + $0x30] sm:$0xff]
    %v134 = vld [vmem:[#allocation5 + $0x38] sm:$0xff]
    %v135 = vld [vmem:[#allocation5 + $0x40] sm:$0xff]
    %v136 = vld [vmem:[#allocation5 + $0x48] sm:$0xff]
    %v137 = vld [vmem:[#allocation5 + $0x50] sm:$0xff]
    %v138 = vld [vmem:[#allocation5 + $0x58] sm:$0xff]
    %v139 = vld [vmem:[#allocation5 + $0x60] sm:$0xff]
    %v140 = vld [vmem:[#allocation5 + $0x68] sm:$0xff]
    %v141 = vld [vmem:[#allocation5 + $0x70] sm:$0xff]
    %v142 = vld [vmem:[#allocation5 + $0x78] sm:$0xff]
    %v143 = vld [vmem:[#allocation7] sm:$0x3]
    %v145 = vperm.slane %v143, 0
    %v146 = vperm.slane %v143, 1
    %v151 = vunpack.c.l.b16 %v125
    %v152 = vunpack.c.l.b16 %v126
    %v153 = vpack.c.b16 %v152, %v151
    %v171 = vunpack.c.l.b16 %v127
    %v172 = vunpack.c.h.b16 %v127
    %v173 = vunpack.c.l.b16 %v128
    %v174 = vunpack.c.h.b16 %v128
    %v175 = vunpack.c.l.b16 %v129
    %v176 = vunpack.c.h.b16 %v129
    %v177 = vunpack.c.l.b16 %v130
    %v178 = vunpack.c.h.b16 %v130
    %v179 = vunpack.c.l.b16 %v131
    %v180 = vunpack.c.h.b16 %v131
    %v181 = vunpack.c.l.b16 %v132
    %v182 = vunpack.c.h.b16 %v132
    %v183 = vunpack.c.l.b16 %v133
    %v184 = vunpack.c.h.b16 %v133
    %v185 = vunpack.c.l.b16 %v134
    %v186 = vunpack.c.h.b16 %v134
    %v187 = vunpack.c.l.b16 %v135
    %v188 = vunpack.c.h.b16 %v135
    %v189 = vunpack.c.l.b16 %v136
    %v190 = vunpack.c.h.b16 %v136
    %v191 = vunpack.c.l.b16 %v137
    %v192 = vunpack.c.h.b16 %v137
    %v193 = vunpack.c.l.b16 %v138
    %v194 = vunpack.c.h.b16 %v138
    %v195 = vunpack.c.l.b16 %v139
    %v196 = vunpack.c.h.b16 %v139
    %v197 = vunpack.c.l.b16 %v140
    %v198 = vunpack.c.h.b16 %v140
    %v199 = vunpack.c.l.b16 %v141
    %v200 = vunpack.c.h.b16 %v141
    %v201 = vunpack.c.l.b16 %v142
    %v202 = vunpack.c.h.b16 %v142
    %v203 = vpack.c.b16 %v173, %v171
    %v204 = vpack.c.b16 %v174, %v172
    %v205 = vpack.c.b16 %v177, %v175
    %v206 = vpack.c.b16 %v178, %v176
    %v207 = vpack.c.b16 %v181, %v179
    %v208 = vpack.c.b16 %v182, %v180
    %v209 = vpack.c.b16 %v185, %v183
    %v210 = vpack.c.b16 %v186, %v184
    %v211 = vpack.c.b16 %v189, %v187
    %v212 = vpack.c.b16 %v190, %v188
    %v213 = vpack.c.b16 %v193, %v191
    %v214 = vpack.c.b16 %v194, %v192
    %v215 = vpack.c.b16 %v197, %v195
    %v216 = vpack.c.b16 %v198, %v196
    %v217 = vpack.c.b16 %v201, %v199
    %v218 = vpack.c.b16 %v202, %v200
    %235 = vmatpush.bf16.msra.mxu0 %v217
    %236 = vmatpush.bf16.msra.mxu0 %v215
    %237 = vmatpush.bf16.msra.mxu0 %v213
    %238 = vmatpush.bf16.msra.mxu0 %v211
    %239 = vmatpush.bf16.msra.mxu0 %v209
    %240 = vmatpush.bf16.msra.mxu0 %v207
    %241 = vmatpush.bf16.msra.mxu0 %v205
    %242 = vmatpush.bf16.msra.mxu0 %v203
    %243 = vmatmul.bf16.gmra.mxu0 %v153
    %v244 = vpop.f32.mrf.mxu0
    %v245 = vadd.f32 %v145, %v244
    %v246 = vpop.f32.mrf.mxu0
    %v247 = vadd.f32 %v145, %v246
    %248 = vdwg.mxu0
    %249 = vmatpush.bf16.msra.mxu0 %v218
    %250 = vmatpush.bf16.msra.mxu0 %v216
    %251 = vmatpush.bf16.msra.mxu0 %v214
    %252 = vmatpush.bf16.msra.mxu0 %v212
    %253 = vmatpush.bf16.msra.mxu0 %v210
    %254 = vmatpush.bf16.msra.mxu0 %v208
    %255 = vmatpush.bf16.msra.mxu0 %v206
    %256 = vmatpush.bf16.msra.mxu0 %v204
    %257 = vmatmul.bf16.gmra.mxu0 %v153
    %v258 = vpop.f32.mrf.mxu0
    %v259 = vadd.f32 %v146, %v258
    %v260 = vpop.f32.mrf.mxu0
    %v261 = vadd.f32 %v146, %v260
    %262 = vdwg.mxu0
    %vm263 = vcmp.gt.f32.partialorder %v245, 0.0
    %vm264 = vcmp.gt.f32.partialorder %v259, 0.0
    %vm265 = vcmp.gt.f32.partialorder %v247, 0.0
    %vm266 = vcmp.gt.f32.partialorder %v261, 0.0
    %v267 = vmul.f32 %v245, 0.01
    %v268 = vmul.f32 %v259, 0.01
    %v269 = vmul.f32 %v247, 0.01
    %v270 = vmul.f32 %v261, 0.01
    %v271 = vsel %vm263, %v245, %v267
    %v272 = vsel %vm264, %v259, %v268
    %v273 = vsel %vm265, %v247, %v269
    %v274 = vsel %vm266, %v261, %v270
    %v275 = vpack.c.bf16 %v273, %v271
    %v276 = vpack.c.bf16 %v274, %v272
    %v277 = vld [vmem:[#allocation8] sm:$0xff]
    %v278 = vld [vmem:[#allocation8 + $0x8] sm:$0xff]
    %v279 = vld [vmem:[#allocation8 + $0x10] sm:$0xff]
    %v280 = vld [vmem:[#allocation8 + $0x18] sm:$0xff]
    %v281 = vld [vmem:[#allocation8 + $0x20] sm:$0xff]
    %v282 = vld [vmem:[#allocation8 + $0x28] sm:$0xff]
    %v283 = vld [vmem:[#allocation8 + $0x30] sm:$0xff]
    %v284 = vld [vmem:[#allocation8 + $0x38] sm:$0xff]
    %v285 = vld [vmem:[#allocation8 + $0x40] sm:$0xff]
    %v286 = vld [vmem:[#allocation8 + $0x48] sm:$0xff]
    %v287 = vld [vmem:[#allocation8 + $0x50] sm:$0xff]
    %v288 = vld [vmem:[#allocation8 + $0x58] sm:$0xff]
    %v289 = vld [vmem:[#allocation8 + $0x60] sm:$0xff]
    %v290 = vld [vmem:[#allocation8 + $0x68] sm:$0xff]
    %v291 = vld [vmem:[#allocation8 + $0x70] sm:$0xff]
    %v292 = vld [vmem:[#allocation8 + $0x78] sm:$0xff]
    %v293 = vld [vmem:[#allocation8 + $0x80] sm:$0xff]
    %v294 = vld [vmem:[#allocation8 + $0x88] sm:$0xff]
    %v295 = vld [vmem:[#allocation8 + $0x90] sm:$0xff]
    %v296 = vld [vmem:[#allocation8 + $0x98] sm:$0xff]
    %v297 = vld [vmem:[#allocation8 + $0xa0] sm:$0xff]
    %v298 = vld [vmem:[#allocation8 + $0xa8] sm:$0xff]
    %v299 = vld [vmem:[#allocation8 + $0xb0] sm:$0xff]
    %v300 = vld [vmem:[#allocation8 + $0xb8] sm:$0xff]
    %v301 = vld [vmem:[#allocation8 + $0xc0] sm:$0xff]
    %v302 = vld [vmem:[#allocation8 + $0xc8] sm:$0xff]
    %v303 = vld [vmem:[#allocation8 + $0xd0] sm:$0xff]
    %v304 = vld [vmem:[#allocation8 + $0xd8] sm:$0xff]
    %v305 = vld [vmem:[#allocation8 + $0xe0] sm:$0xff]
    %v306 = vld [vmem:[#allocation8 + $0xe8] sm:$0xff]
    %v307 = vld [vmem:[#allocation8 + $0xf0] sm:$0xff]
    %v308 = vld [vmem:[#allocation8 + $0xf8] sm:$0xff]
    %v309 = vld [vmem:[%s4] sm:$0x3]
    %v311 = vperm.slane %v309, 0
    %v312 = vperm.slane %v309, 1
    %v347 = vunpack.c.l.b16 %v277
    %v348 = vunpack.c.h.b16 %v277
    %v349 = vunpack.c.l.b16 %v278
    %v350 = vunpack.c.h.b16 %v278
    %v351 = vunpack.c.l.b16 %v279
    %v352 = vunpack.c.h.b16 %v279
    %v353 = vunpack.c.l.b16 %v280
    %v354 = vunpack.c.h.b16 %v280
    %v355 = vunpack.c.l.b16 %v281
    %v356 = vunpack.c.h.b16 %v281
    %v357 = vunpack.c.l.b16 %v282
    %v358 = vunpack.c.h.b16 %v282
    %v359 = vunpack.c.l.b16 %v283
    %v360 = vunpack.c.h.b16 %v283
    %v361 = vunpack.c.l.b16 %v284
    %v362 = vunpack.c.h.b16 %v284
    %v363 = vunpack.c.l.b16 %v285
    %v364 = vunpack.c.h.b16 %v285
    %v365 = vunpack.c.l.b16 %v286
    %v366 = vunpack.c.h.b16 %v286
    %v367 = vunpack.c.l.b16 %v287
    %v368 = vunpack.c.h.b16 %v287
    %v369 = vunpack.c.l.b16 %v288
    %v370 = vunpack.c.h.b16 %v288
    %v371 = vunpack.c.l.b16 %v289
    %v372 = vunpack.c.h.b16 %v289
    %v373 = vunpack.c.l.b16 %v290
    %v374 = vunpack.c.h.b16 %v290
    %v375 = vunpack.c.l.b16 %v291
    %v376 = vunpack.c.h.b16 %v291
    %v377 = vunpack.c.l.b16 %v292
    %v378 = vunpack.c.h.b16 %v292
    %v379 = vunpack.c.l.b16 %v293
    %v380 = vunpack.c.h.b16 %v293
    %v381 = vunpack.c.l.b16 %v294
    %v382 = vunpack.c.h.b16 %v294
    %v383 = vunpack.c.l.b16 %v295
    %v384 = vunpack.c.h.b16 %v295
    %v385 = vunpack.c.l.b16 %v296
    %v386 = vunpack.c.h.b16 %v296
    %v387 = vunpack.c.l.b16 %v297
    %v388 = vunpack.c.h.b16 %v297
    %v389 = vunpack.c.l.b16 %v298
    %v390 = vunpack.c.h.b16 %v298
    %v391 = vunpack.c.l.b16 %v299
    %v392 = vunpack.c.h.b16 %v299
    %v393 = vunpack.c.l.b16 %v300
    %v394 = vunpack.c.h.b16 %v300
    %v395 = vunpack.c.l.b16 %v301
    %v396 = vunpack.c.h.b16 %v301
    %v397 = vunpack.c.l.b16 %v302
    %v398 = vunpack.c.h.b16 %v302
    %v399 = vunpack.c.l.b16 %v303
    %v400 = vunpack.c.h.b16 %v303
    %v401 = vunpack.c.l.b16 %v304
    %v402 = vunpack.c.h.b16 %v304
    %v403 = vunpack.c.l.b16 %v305
    %v404 = vunpack.c.h.b16 %v305
    %v405 = vunpack.c.l.b16 %v306
    %v406 = vunpack.c.h.b16 %v306
    %v407 = vunpack.c.l.b16 %v307
    %v408 = vunpack.c.h.b16 %v307
    %v409 = vunpack.c.l.b16 %v308
    %v410 = vunpack.c.h.b16 %v308
    %v411 = vpack.c.b16 %v349, %v347
    %v412 = vpack.c.b16 %v350, %v348
    %v413 = vpack.c.b16 %v353, %v351
    %v414 = vpack.c.b16 %v354, %v352
    %v415 = vpack.c.b16 %v357, %v355
    %v416 = vpack.c.b16 %v358, %v356
    %v417 = vpack.c.b16 %v361, %v359
    %v418 = vpack.c.b16 %v362, %v360
    %v419 = vpack.c.b16 %v365, %v363
    %v420 = vpack.c.b16 %v366, %v364
    %v421 = vpack.c.b16 %v369, %v367
    %v422 = vpack.c.b16 %v370, %v368
    %v423 = vpack.c.b16 %v373, %v371
    %v424 = vpack.c.b16 %v374, %v372
    %v425 = vpack.c.b16 %v377, %v375
    %v426 = vpack.c.b16 %v378, %v376
    %v427 = vpack.c.b16 %v381, %v379
    %v428 = vpack.c.b16 %v382, %v380
    %v429 = vpack.c.b16 %v385, %v383
    %v430 = vpack.c.b16 %v386, %v384
    %v431 = vpack.c.b16 %v389, %v387
    %v432 = vpack.c.b16 %v390, %v388
    %v433 = vpack.c.b16 %v393, %v391
    %v434 = vpack.c.b16 %v394, %v392
    %v435 = vpack.c.b16 %v397, %v395
    %v436 = vpack.c.b16 %v398, %v396
    %v437 = vpack.c.b16 %v401, %v399
    %v438 = vpack.c.b16 %v402, %v400
    %v439 = vpack.c.b16 %v405, %v403
    %v440 = vpack.c.b16 %v406, %v404
    %v441 = vpack.c.b16 %v409, %v407
    %v442 = vpack.c.b16 %v410, %v408
    %475 = vmatpush.bf16.msra.mxu0 %v425
    %476 = vmatpush.bf16.msra.mxu0 %v423
    %477 = vmatpush.bf16.msra.mxu0 %v421
    %478 = vmatpush.bf16.msra.mxu0 %v419
    %479 = vmatpush.bf16.msra.mxu0 %v417
    %480 = vmatpush.bf16.msra.mxu0 %v415
    %481 = vmatpush.bf16.msra.mxu0 %v413
    %482 = vmatpush.bf16.msra.mxu0 %v411
    %483 = vmatmul.bf16.gmra.mxu0 %v275
    %v484 = vpop.f32.mrf.mxu0
    %v485 = vadd.f32 %v311, %v484
    %v486 = vpop.f32.mrf.mxu0
    %v487 = vadd.f32 %v311, %v486
    %488 = vdwg.mxu0
    %489 = vmatpush.bf16.msra.mxu0 %v441
    %490 = vmatpush.bf16.msra.mxu0 %v439
    %491 = vmatpush.bf16.msra.mxu0 %v437
    %492 = vmatpush.bf16.msra.mxu0 %v435
    %493 = vmatpush.bf16.msra.mxu0 %v433
    %494 = vmatpush.bf16.msra.mxu0 %v431
    %495 = vmatpush.bf16.msra.mxu0 %v429
    %496 = vmatpush.bf16.msra.mxu0 %v427
    %497 = vmatmul.bf16.gmra.mxu0 %v276
    %v498 = vpop.f32.mrf.mxu0
    %v499 = vadd.f32 %v485, %v498
    %v500 = vpop.f32.mrf.mxu0
    %v501 = vadd.f32 %v487, %v500
    %502 = vdwg.mxu0
    %503 = vmatpush.bf16.msra.mxu0 %v426
    %504 = vmatpush.bf16.msra.mxu0 %v424
    %505 = vmatpush.bf16.msra.mxu0 %v422
    %506 = vmatpush.bf16.msra.mxu0 %v420
    %507 = vmatpush.bf16.msra.mxu0 %v418
    %508 = vmatpush.bf16.msra.mxu0 %v416
    %509 = vmatpush.bf16.msra.mxu0 %v414
    %510 = vmatpush.bf16.msra.mxu0 %v412
    %511 = vmatmul.bf16.gmra.mxu0 %v275
    %v512 = vpop.f32.mrf.mxu0
    %v513 = vadd.f32 %v312, %v512
    %v514 = vpop.f32.mrf.mxu0
    %v515 = vadd.f32 %v312, %v514
    %516 = vdwg.mxu0
    %517 = vmatpush.bf16.msra.mxu0 %v442
    %518 = vmatpush.bf16.msra.mxu0 %v440
    %519 = vmatpush.bf16.msra.mxu0 %v438
    %520 = vmatpush.bf16.msra.mxu0 %v436
    %521 = vmatpush.bf16.msra.mxu0 %v434
    %522 = vmatpush.bf16.msra.mxu0 %v432
    %523 = vmatpush.bf16.msra.mxu0 %v430
    %524 = vmatpush.bf16.msra.mxu0 %v428
    %525 = vmatmul.bf16.gmra.mxu0 %v276
    %v526 = vpop.f32.mrf.mxu0
    %v527 = vadd.f32 %v513, %v526
    %v528 = vpop.f32.mrf.mxu0
    %v529 = vadd.f32 %v515, %v528
    %530 = vdwg.mxu0
    %vm531 = vcmp.gt.f32.partialorder %v499, 0.0
    %vm532 = vcmp.gt.f32.partialorder %v527, 0.0
    %vm533 = vcmp.gt.f32.partialorder %v501, 0.0
    %vm534 = vcmp.gt.f32.partialorder %v529, 0.0
    %v535 = vmul.f32 %v499, 0.01
    %v536 = vmul.f32 %v527, 0.01
    %v537 = vmul.f32 %v501, 0.01
    %v538 = vmul.f32 %v529, 0.01
    %v539 = vsel %vm531, %v499, %v535
    %v540 = vsel %vm532, %v527, %v536
    %v541 = vsel %vm533, %v501, %v537
    %v542 = vsel %vm534, %v529, %v538
    %v543 = vpack.c.bf16 %v541, %v539
    %v544 = vpack.c.bf16 %v542, %v540
    %v545 = vld [vmem:[#allocation10] sm:$0xff]
    %v546 = vld [vmem:[#allocation10 + $0x8] sm:$0xff]
    %v547 = vld [vmem:[#allocation10 + $0x10] sm:$0xff]
    %v548 = vld [vmem:[#allocation10 + $0x18] sm:$0xff]
    %v549 = vld [vmem:[#allocation10 + $0x20] sm:$0xff]
    %v550 = vld [vmem:[#allocation10 + $0x28] sm:$0xff]
    %v551 = vld [vmem:[#allocation10 + $0x30] sm:$0xff]
    %v552 = vld [vmem:[#allocation10 + $0x38] sm:$0xff]
    %v553 = vld [vmem:[#allocation10 + $0x40] sm:$0xff]
    %v554 = vld [vmem:[#allocation10 + $0x48] sm:$0xff]
    %v555 = vld [vmem:[#allocation10 + $0x50] sm:$0xff]
    %v556 = vld [vmem:[#allocation10 + $0x58] sm:$0xff]
    %v557 = vld [vmem:[#allocation10 + $0x60] sm:$0xff]
    %v558 = vld [vmem:[#allocation10 + $0x68] sm:$0xff]
    %v559 = vld [vmem:[#allocation10 + $0x70] sm:$0xff]
    %v560 = vld [vmem:[#allocation10 + $0x78] sm:$0xff]
    %v561 = vld [vmem:[#allocation10 + $0x80] sm:$0xff]
    %v562 = vld [vmem:[#allocation10 + $0x88] sm:$0xff]
    %v563 = vld [vmem:[#allocation10 + $0x90] sm:$0xff]
    %v564 = vld [vmem:[#allocation10 + $0x98] sm:$0xff]
    %v565 = vld [vmem:[#allocation10 + $0xa0] sm:$0xff]
    %v566 = vld [vmem:[#allocation10 + $0xa8] sm:$0xff]
    %v567 = vld [vmem:[#allocation10 + $0xb0] sm:$0xff]
    %v568 = vld [vmem:[#allocation10 + $0xb8] sm:$0xff]
    %v569 = vld [vmem:[#allocation10 + $0xc0] sm:$0xff]
    %v570 = vld [vmem:[#allocation10 + $0xc8] sm:$0xff]
    %v571 = vld [vmem:[#allocation10 + $0xd0] sm:$0xff]
    %v572 = vld [vmem:[#allocation10 + $0xd8] sm:$0xff]
    %v573 = vld [vmem:[#allocation10 + $0xe0] sm:$0xff]
    %v574 = vld [vmem:[#allocation10 + $0xe8] sm:$0xff]
    %v575 = vld [vmem:[#allocation10 + $0xf0] sm:$0xff]
    %v576 = vld [vmem:[#allocation10 + $0xf8] sm:$0xff]
    %v577 = vld [vmem:[%s6] sm:$0x3]
    %v579 = vperm.slane %v577, 0
    %v580 = vperm.slane %v577, 1
    %v615 = vunpack.c.l.b16 %v545
    %v616 = vunpack.c.h.b16 %v545
    %v617 = vunpack.c.l.b16 %v546
    %v618 = vunpack.c.h.b16 %v546
    %v619 = vunpack.c.l.b16 %v547
    %v620 = vunpack.c.h.b16 %v547
    %v621 = vunpack.c.l.b16 %v548
    %v622 = vunpack.c.h.b16 %v548
    %v623 = vunpack.c.l.b16 %v549
    %v624 = vunpack.c.h.b16 %v549
    %v625 = vunpack.c.l.b16 %v550
    %v626 = vunpack.c.h.b16 %v550
    %v627 = vunpack.c.l.b16 %v551
    %v628 = vunpack.c.h.b16 %v551
    %v629 = vunpack.c.l.b16 %v552
    %v630 = vunpack.c.h.b16 %v552
    %v631 = vunpack.c.l.b16 %v553
    %v632 = vunpack.c.h.b16 %v553
    %v633 = vunpack.c.l.b16 %v554
    %v634 = vunpack.c.h.b16 %v554
    %v635 = vunpack.c.l.b16 %v555
    %v636 = vunpack.c.h.b16 %v555
    %v637 = vunpack.c.l.b16 %v556
    %v638 = vunpack.c.h.b16 %v556
    %v639 = vunpack.c.l.b16 %v557
    %v640 = vunpack.c.h.b16 %v557
    %v641 = vunpack.c.l.b16 %v558
    %v642 = vunpack.c.h.b16 %v558
    %v643 = vunpack.c.l.b16 %v559
    %v644 = vunpack.c.h.b16 %v559
    %v645 = vunpack.c.l.b16 %v560
    %v646 = vunpack.c.h.b16 %v560
    %v647 = vunpack.c.l.b16 %v561
    %v648 = vunpack.c.h.b16 %v561
    %v649 = vunpack.c.l.b16 %v562
    %v650 = vunpack.c.h.b16 %v562
    %v651 = vunpack.c.l.b16 %v563
    %v652 = vunpack.c.h.b16 %v563
    %v653 = vunpack.c.l.b16 %v564
    %v654 = vunpack.c.h.b16 %v564
    %v655 = vunpack.c.l.b16 %v565
    %v656 = vunpack.c.h.b16 %v565
    %v657 = vunpack.c.l.b16 %v566
    %v658 = vunpack.c.h.b16 %v566
    %v659 = vunpack.c.l.b16 %v567
    %v660 = vunpack.c.h.b16 %v567
    %v661 = vunpack.c.l.b16 %v568
    %v662 = vunpack.c.h.b16 %v568
    %v663 = vunpack.c.l.b16 %v569
    %v664 = vunpack.c.h.b16 %v569
    %v665 = vunpack.c.l.b16 %v570
    %v666 = vunpack.c.h.b16 %v570
    %v667 = vunpack.c.l.b16 %v571
    %v668 = vunpack.c.h.b16 %v571
    %v669 = vunpack.c.l.b16 %v572
    %v670 = vunpack.c.h.b16 %v572
    %v671 = vunpack.c.l.b16 %v573
    %v672 = vunpack.c.h.b16 %v573
    %v673 = vunpack.c.l.b16 %v574
    %v674 = vunpack.c.h.b16 %v574
    %v675 = vunpack.c.l.b16 %v575
    %v676 = vunpack.c.h.b16 %v575
    %v677 = vunpack.c.l.b16 %v576
    %v678 = vunpack.c.h.b16 %v576
    %v679 = vpack.c.b16 %v617, %v615
    %v680 = vpack.c.b16 %v618, %v616
    %v681 = vpack.c.b16 %v621, %v619
    %v682 = vpack.c.b16 %v622, %v620
    %v683 = vpack.c.b16 %v625, %v623
    %v684 = vpack.c.b16 %v626, %v624
    %v685 = vpack.c.b16 %v629, %v627
    %v686 = vpack.c.b16 %v630, %v628
    %v687 = vpack.c.b16 %v633, %v631
    %v688 = vpack.c.b16 %v634, %v632
    %v689 = vpack.c.b16 %v637, %v635
    %v690 = vpack.c.b16 %v638, %v636
    %v691 = vpack.c.b16 %v641, %v639
    %v692 = vpack.c.b16 %v642, %v640
    %v693 = vpack.c.b16 %v645, %v643
    %v694 = vpack.c.b16 %v646, %v644
    %v695 = vpack.c.b16 %v649, %v647
    %v696 = vpack.c.b16 %v650, %v648
    %v697 = vpack.c.b16 %v653, %v651
    %v698 = vpack.c.b16 %v654, %v652
    %v699 = vpack.c.b16 %v657, %v655
    %v700 = vpack.c.b16 %v658, %v656
    %v701 = vpack.c.b16 %v661, %v659
    %v702 = vpack.c.b16 %v662, %v660
    %v703 = vpack.c.b16 %v665, %v663
    %v704 = vpack.c.b16 %v666, %v664
    %v705 = vpack.c.b16 %v669, %v667
    %v706 = vpack.c.b16 %v670, %v668
    %v707 = vpack.c.b16 %v673, %v671
    %v708 = vpack.c.b16 %v674, %v672
    %v709 = vpack.c.b16 %v677, %v675
    %v710 = vpack.c.b16 %v678, %v676
    %743 = vmatpush.bf16.msra.mxu0 %v693
    %744 = vmatpush.bf16.msra.mxu0 %v691
    %745 = vmatpush.bf16.msra.mxu0 %v689
    %746 = vmatpush.bf16.msra.mxu0 %v687
    %747 = vmatpush.bf16.msra.mxu0 %v685
    %748 = vmatpush.bf16.msra.mxu0 %v683
    %749 = vmatpush.bf16.msra.mxu0 %v681
    %750 = vmatpush.bf16.msra.mxu0 %v679
    %751 = vmatmul.bf16.gmra.mxu0 %v543
    %v752 = vpop.f32.mrf.mxu0
    %v753 = vadd.f32 %v579, %v752
    %v754 = vpop.f32.mrf.mxu0
    %v755 = vadd.f32 %v579, %v754
    %756 = vdwg.mxu0
    %757 = vmatpush.bf16.msra.mxu0 %v709
    %758 = vmatpush.bf16.msra.mxu0 %v707
    %759 = vmatpush.bf16.msra.mxu0 %v705
    %760 = vmatpush.bf16.msra.mxu0 %v703
    %761 = vmatpush.bf16.msra.mxu0 %v701
    %762 = vmatpush.bf16.msra.mxu0 %v699
    %763 = vmatpush.bf16.msra.mxu0 %v697
    %764 = vmatpush.bf16.msra.mxu0 %v695
    %765 = vmatmul.bf16.gmra.mxu0 %v544
    %v766 = vpop.f32.mrf.mxu0
    %v767 = vadd.f32 %v753, %v766
    %v768 = vpop.f32.mrf.mxu0
    %v769 = vadd.f32 %v755, %v768
    %770 = vdwg.mxu0
    %771 = vmatpush.bf16.msra.mxu0 %v694
    %772 = vmatpush.bf16.msra.mxu0 %v692
    %773 = vmatpush.bf16.msra.mxu0 %v690
    %774 = vmatpush.bf16.msra.mxu0 %v688
    %775 = vmatpush.bf16.msra.mxu0 %v686
    %776 = vmatpush.bf16.msra.mxu0 %v684
    %777 = vmatpush.bf16.msra.mxu0 %v682
    %778 = vmatpush.bf16.msra.mxu0 %v680
    %779 = vmatmul.bf16.gmra.mxu0 %v543
    %v780 = vpop.f32.mrf.mxu0
    %v781 = vadd.f32 %v580, %v780
    %v782 = vpop.f32.mrf.mxu0
    %v783 = vadd.f32 %v580, %v782
    %784 = vdwg.mxu0
    %785 = vmatpush.bf16.msra.mxu0 %v710
    %786 = vmatpush.bf16.msra.mxu0 %v708
    %787 = vmatpush.bf16.msra.mxu0 %v706
    %788 = vmatpush.bf16.msra.mxu0 %v704
    %789 = vmatpush.bf16.msra.mxu0 %v702
    %790 = vmatpush.bf16.msra.mxu0 %v700
    %791 = vmatpush.bf16.msra.mxu0 %v698
    %792 = vmatpush.bf16.msra.mxu0 %v696
    %793 = vmatmul.bf16.gmra.mxu0 %v544
    %v794 = vpop.f32.mrf.mxu0
    %v795 = vadd.f32 %v781, %v794
    %v796 = vpop.f32.mrf.mxu0
    %v797 = vadd.f32 %v783, %v796
    %798 = vdwg.mxu0
    %vm799 = vcmp.gt.f32.partialorder %v767, 0.0
    %vm800 = vcmp.gt.f32.partialorder %v795, 0.0
    %vm801 = vcmp.gt.f32.partialorder %v769, 0.0
    %vm802 = vcmp.gt.f32.partialorder %v797, 0.0
    %v803 = vmul.f32 %v767, 0.01
    %v804 = vmul.f32 %v795, 0.01
    %v805 = vmul.f32 %v769, 0.01
    %v806 = vmul.f32 %v797, 0.01
    %v807 = vsel %vm799, %v767, %v803
    %v808 = vsel %vm800, %v795, %v804
    %v809 = vsel %vm801, %v769, %v805
    %v810 = vsel %vm802, %v797, %v806
    %v811 = vpack.c.bf16 %v809, %v807
    %v812 = vpack.c.bf16 %v810, %v808
    %v813 = vld [vmem:[#allocation11] sm:$0xf]
    %v814 = vld [vmem:[#allocation11 + $0x4] sm:$0xf]
    %v815 = vld [vmem:[#allocation11 + $0x8] sm:$0xf]
    %v816 = vld [vmem:[#allocation11 + $0xc] sm:$0xf]
    %v817 = vld [vmem:[#allocation11 + $0x10] sm:$0xf]
    %v818 = vld [vmem:[#allocation11 + $0x14] sm:$0xf]
    %v819 = vld [vmem:[#allocation11 + $0x18] sm:$0xf]
    %v820 = vld [vmem:[#allocation11 + $0x1c] sm:$0xf]
    %v821 = vld [vmem:[#allocation11 + $0x20] sm:$0xf]
    %v822 = vld [vmem:[#allocation11 + $0x24] sm:$0xf]
    %v823 = vld [vmem:[#allocation11 + $0x28] sm:$0xf]
    %v824 = vld [vmem:[#allocation11 + $0x2c] sm:$0xf]
    %v825 = vld [vmem:[#allocation11 + $0x30] sm:$0xf]
    %v826 = vld [vmem:[#allocation11 + $0x34] sm:$0xf]
    %v827 = vld [vmem:[#allocation11 + $0x38] sm:$0xf]
    %v828 = vld [vmem:[#allocation11 + $0x3c] sm:$0xf]
    %v829 = vld [vmem:[#allocation11 + $0x40] sm:$0xf]
    %v830 = vld [vmem:[#allocation11 + $0x44] sm:$0xf]
    %v831 = vld [vmem:[#allocation11 + $0x48] sm:$0xf]
    %v832 = vld [vmem:[#allocation11 + $0x4c] sm:$0xf]
    %v833 = vld [vmem:[#allocation11 + $0x50] sm:$0xf]
    %v834 = vld [vmem:[#allocation11 + $0x54] sm:$0xf]
    %v835 = vld [vmem:[#allocation11 + $0x58] sm:$0xf]
    %v836 = vld [vmem:[#allocation11 + $0x5c] sm:$0xf]
    %v837 = vld [vmem:[#allocation11 + $0x60] sm:$0xf]
    %v838 = vld [vmem:[#allocation11 + $0x64] sm:$0xf]
    %v839 = vld [vmem:[#allocation11 + $0x68] sm:$0xf]
    %v840 = vld [vmem:[#allocation11 + $0x6c] sm:$0xf]
    %v841 = vld [vmem:[#allocation11 + $0x70] sm:$0xf]
    %v842 = vld [vmem:[#allocation11 + $0x74] sm:$0xf]
    %v843 = vld [vmem:[#allocation11 + $0x78] sm:$0xf]
    %v844 = vld [vmem:[#allocation11 + $0x7c] sm:$0xf]
    %v845 = vld [vmem:[%s8] sm:$0x1]
    %v847 = vperm.slane %v845, 0
    %v881 = vunpack.c.l.b16 %v813
    %v882 = vunpack.c.l.b16 %v814
    %v883 = vunpack.c.l.b16 %v815
    %v884 = vunpack.c.l.b16 %v816
    %v885 = vunpack.c.l.b16 %v817
    %v886 = vunpack.c.l.b16 %v818
    %v887 = vunpack.c.l.b16 %v819
    %v888 = vunpack.c.l.b16 %v820
    %v889 = vunpack.c.l.b16 %v821
    %v890 = vunpack.c.l.b16 %v822
    %v891 = vunpack.c.l.b16 %v823
    %v892 = vunpack.c.l.b16 %v824
    %v893 = vunpack.c.l.b16 %v825
    %v894 = vunpack.c.l.b16 %v826
    %v895 = vunpack.c.l.b16 %v827
    %v896 = vunpack.c.l.b16 %v828
    %v897 = vunpack.c.l.b16 %v829
    %v898 = vunpack.c.l.b16 %v830
    %v899 = vunpack.c.l.b16 %v831
    %v900 = vunpack.c.l.b16 %v832
    %v901 = vunpack.c.l.b16 %v833
    %v902 = vunpack.c.l.b16 %v834
    %v903 = vunpack.c.l.b16 %v835
    %v904 = vunpack.c.l.b16 %v836
    %v905 = vunpack.c.l.b16 %v837
    %v906 = vunpack.c.l.b16 %v838
    %v907 = vunpack.c.l.b16 %v839
    %v908 = vunpack.c.l.b16 %v840
    %v909 = vunpack.c.l.b16 %v841
    %v910 = vunpack.c.l.b16 %v842
    %v911 = vunpack.c.l.b16 %v843
    %v912 = vunpack.c.l.b16 %v844
    %v913 = vpack.c.b16 %v882, %v881
    %v914 = vpack.c.b16 %v884, %v883
    %v915 = vpack.c.b16 %v886, %v885
    %v916 = vpack.c.b16 %v888, %v887
    %v917 = vpack.c.b16 %v890, %v889
    %v918 = vpack.c.b16 %v892, %v891
    %v919 = vpack.c.b16 %v894, %v893
    %v920 = vpack.c.b16 %v896, %v895
    %v921 = vpack.c.b16 %v898, %v897
    %v922 = vpack.c.b16 %v900, %v899
    %v923 = vpack.c.b16 %v902, %v901
    %v924 = vpack.c.b16 %v904, %v903
    %v925 = vpack.c.b16 %v906, %v905
    %v926 = vpack.c.b16 %v908, %v907
    %v927 = vpack.c.b16 %v910, %v909
    %v928 = vpack.c.b16 %v912, %v911
    %945 = vmatpush.bf16.msra.mxu0 %v920
    %946 = vmatpush.bf16.msra.mxu0 %v919
    %947 = vmatpush.bf16.msra.mxu0 %v918
    %948 = vmatpush.bf16.msra.mxu0 %v917
    %949 = vmatpush.bf16.msra.mxu0 %v916
    %950 = vmatpush.bf16.msra.mxu0 %v915
    %951 = vmatpush.bf16.msra.mxu0 %v914
    %952 = vmatpush.bf16.msra.mxu0 %v913
    %953 = vmatmul.bf16.gmra.mxu0 %v811
    %v954 = vpop.f32.mrf.mxu0
    %v955 = vadd.f32 %v847, %v954
    %v956 = vpop.f32.mrf.mxu0
    %v957 = vadd.f32 %v847, %v956
    %958 = vdwg.mxu0
    %959 = vmatpush.bf16.msra.mxu0 %v928
    %960 = vmatpush.bf16.msra.mxu0 %v927
    %961 = vmatpush.bf16.msra.mxu0 %v926
    %962 = vmatpush.bf16.msra.mxu0 %v925
    %963 = vmatpush.bf16.msra.mxu0 %v924
    %964 = vmatpush.bf16.msra.mxu0 %v923
    %965 = vmatpush.bf16.msra.mxu0 %v922
    %966 = vmatpush.bf16.msra.mxu0 %v921
    %967 = vmatmul.bf16.gmra.mxu0 %v812
    %v968 = vpop.f32.mrf.mxu0
    %v969 = vadd.f32 %v955, %v968
    %v970 = vpop.f32.mrf.mxu0
    %v971 = vadd.f32 %v957, %v970
    %972 = vdwg.mxu0
    %973 = vmax.xlane.f32.xlu0 %v969
    %v974 = vpop.xlane.xlu0 %973
    %975 = vmax.xlane.f32.xlu0 %v971
    %v976 = vpop.xlane.xlu0 %975
    %v977 = vsub.f32 %v969, %v974
    %v978 = vsub.f32 %v971, %v976
    %v979 = vmul.f32 %v977, 1.442695
    %v980 = vpow.pop %v979
    %v981 = vmul.f32 %v978, 1.442695
    %v982 = vpow.pop %v981
    %983 = vadd.xlane.f32.xlu0 %v980
    %v984 = vpop.xlane.xlu0 %983
    %985 = vadd.xlane.f32.xlu0 %v982
    %v986 = vpop.xlane.xlu0 %985
    %v987 = vrcp.pop %v984
    %v988 = vmul.f32 %v984, %v987
    %v989 = vsub.f32 1.0, %v988
    %v990 = vmul.f32 %v987, %v989
    %v991 = vadd.f32 %v987, %v990
    %vm992 = vweird.f32 %v984
    %vm993 = vweird.f32 %v987
    %vm994 = vmor %vm992, %vm993
    %v995 = vsel %vm994, %v987, %v991
    %v996 = vand.u32 2147483647, %v984
    %vm997 = vcmp.eq.f32.partialorder %v996, 8.507059e+37
    %v998 = vand.u32 %v984, 2147483648
    %v999 = vor.u32 1.1754944e-38, %v998
    %v1000 = vsel %vm997, %v999, %v995
    %v1001 = vmul.f32 %v980, %v1000
    %v1002 = vrcp.pop %v986
    %v1003 = vmul.f32 %v986, %v1002
    %v1004 = vsub.f32 1.0, %v1003
    %v1005 = vmul.f32 %v1002, %v1004
    %v1006 = vadd.f32 %v1002, %v1005
    %vm1007 = vweird.f32 %v986
    %vm1008 = vweird.f32 %v1002
    %vm1009 = vmor %vm1007, %vm1008
    %v1010 = vsel %vm1009, %v1002, %v1006
    %v1011 = vand.u32 2147483647, %v986
    %vm1012 = vcmp.eq.f32.partialorder %v1011, 8.507059e+37
    %v1013 = vand.u32 %v986, 2147483648
    %v1014 = vor.u32 1.1754944e-38, %v1013
    %v1015 = vsel %vm1012, %v1014, %v1010
    %v1016 = vmul.f32 %v982, %v1015
    %1017 = vst [vmem:[#allocation13] sm:$0xff] %v1001
    %1018 = vst [vmem:[#allocation13 + $0x8] sm:$0xff] %v1016
    // Predicated region
    $region62: #{tpu_custom_call.1} parent=1 // pred_check
      _
    $region63: #{tpu_custom_call.1} parent=1 // pred_check_branch
      %1020 = sbr.rel (0) target = $region65
    $region64: #{tpu_custom_call.1} parent=1 // pred_region
      %1022 = vsyncadd [#allocation4], 0
      %s1023 = sshll.u32 [#allocation13], 4
      %s1024 = int_to_ptr.vmem [resolvable:$true] %s1023
      %s1025 = sshll.u32 %s9, 4
      %s1026 = int_to_ptr.hbm [resolvable:$true] %s1025
      %1031 = dma.vmem_to_hbm [thread:$0]  %s1024, 256, %s1026, [#allocation4], 128, 128, 8
    $region65: #{tpu_custom_call.1} parent=1 // pred_fallthru
      _
    // Predicated region
    $region66: #{tpu_custom_call.1} parent=1 // pred_check
      _
    $region67: #{tpu_custom_call.1} parent=1 // pred_check_branch
      %1033 = sbr.rel (0) target = $region69
    $region68: #{tpu_custom_call.1} parent=1 // pred_region
      %1035 = dma.done [#allocation4], 256
    $region69: #{tpu_custom_call.1} parent=1 // pred_fallthru
      _
    %1036 = vsyncpa [#allocation3], 1
    %1037 = vsyncpa [#allocation6], 1
    %1038 = vsyncpa [#allocation9], 1
    %1039 = vsyncpa [#allocation12], 1
    %1040 = vsyncpa [#allocation4], 1

</llo_original>
